<compile_context>
chip_gen: v7x
topology: tpu7x:2x2x1
jax: 0.10.0
libtpu: 0.0.40
codegen_flags: <defaults>
</compile_context>

<pallas_src>
import functools

import jax
import jax.numpy as jnp
from jax import lax
from jax.experimental import pallas as pl
from jax.experimental.pallas import tpu as pltpu

EPS = 1e-5  # nn.GroupNorm default eps


def ublock_kernel(x_ref, wc_ref, gc_ref, bc_ref, w2_ref, g2_ref, b2_ref,
                  o_ref, *, H, W, Cmid_p):
    S = H * W
    x = x_ref[0]                                   # (Cin_p, S) f32, channel-major

    # --- per-tap validity masks, computed once and shared by both 3x3 convs ---
    p = lax.broadcasted_iota(jnp.int32, (1, S), 1)           # flat spatial index
    if (W & (W - 1)) == 0:
        xx = p & (W - 1)                                      # p mod W (W power of two)
    else:
        xx = p % W
    row_ok = {-1: p >= W, 0: None, 1: p < (H - 1) * W}        # 0 <= y+dy < H
    col_ok = {-1: xx >= 1, 0: None, 1: xx <= W - 2}           # 0 <= x+dx < W
    masks = {}
    for dy in (-1, 0, 1):
        for dx in (-1, 0, 1):
            parts = [m for m in (row_ok[dy], col_ok[dx]) if m is not None]
            if not parts:
                masks[(dy, dx)] = None
            elif len(parts) == 1:
                masks[(dy, dx)] = parts[0]
            else:
                masks[(dy, dx)] = parts[0] & parts[1]

    def im2col(inp):
        # inp: (C, S) -> (9*C, S) via XLU lane-rolls + edge masks (no VMEM scratch copies).
        slabs = []
        for ky in range(3):
            for kx in range(3):
                dy, dx = ky - 1, kx - 1
                s = dy * W + dx
                sh = inp if s == 0 else pltpu.roll(inp, shift=(-s) % S, axis=1)
                m = masks[(dy, dx)]
                if m is not None:
                    sh = jnp.where(m, sh, 0.0)
                slabs.append(sh)
        return jnp.concatenate(slabs, axis=0)

    def inorm(y, g, b):
        # GroupNorm(C, C, affine) == per-channel instance norm; lane-axis reductions.
        mean = jnp.mean(y, axis=1, keepdims=True)
        c = y - mean
        var = jnp.mean(c * c, axis=1, keepdims=True)
        return c * lax.rsqrt(var + EPS) * g + b

    # conv1 (3x3) and the 1x1 shortcut conv fused into one MXU matmul (K = 9*Cin),
    # followed by one stacked instance-norm over both branches' channels.
    comb = jnp.dot(wc_ref[...], im2col(x), preferred_element_type=jnp.float32)
    comb_n = inorm(comb, gc_ref[...], bc_ref[...])
    act1 = jnp.maximum(comb_n[:Cmid_p], 0.0)       # relu(IN(conv1(x)))
    sc = comb_n[Cmid_p:]                           # IN(conv_1x1(x))  (Identity pertubration)

    # conv2 (3x3) -> (Identity pertubration) -> IN
    out2 = inorm(jnp.dot(w2_ref[...], im2col(act1),
                         preferred_element_type=jnp.float32),
                 g2_ref[...], b2_ref[...])

    # residual add + final ReLU; lane-dense store (last dim = H*W)
    o_ref[0] = jnp.maximum(out2 + sc, 0.0).astype(o_ref.dtype)


def _round_up(n, m):
    return (n + m - 1) // m * m


def ublock_forward(x_nchw, params):
    """x_nchw: (N, Cin, H, W) (PyTorch layout). Returns (N, planes, H, W)."""
    w1, g1, b1, w2, g2, b2, ws, gs, bs = params
    N, Cin, H, W = x_nchw.shape
    Cmid, Cout = w1.shape[-1], w2.shape[-1]
    S = H * W
    Cin_p, Cmid_p, Cout_p = (_round_up(c, 8) for c in (Cin, Cmid, Cout))

    # Glue (one-time, tiny): channel pad to sublane multiples (no-op when channel
    # counts are already multiples of 8) + weight flattening for the im2col matmuls.
    x_flat = jnp.pad(x_nchw.reshape(N, Cin, S), ((0, 0), (0, Cin_p - Cin), (0, 0)))

    def flat3x3(w, ci_p, co_p):        # HWIO (3,3,ci,co) -> (co_p, 9*ci_p)
        w = jnp.pad(w, ((0, 0), (0, 0), (0, ci_p - w.shape[2]), (0, co_p - w.shape[3])))
        return jnp.transpose(w, (3, 0, 1, 2)).reshape(co_p, 9 * ci_p)

    def padvec(v, c_p):                # (C,) -> (c_p, 1)
        return jnp.pad(v, (0, c_p - v.shape[0])).reshape(c_p, 1)

    # Combined first-stage weight: conv1 rows on top, 1x1 shortcut embedded at the
    # centre tap (slab index 4 of the 3x3 im2col layout) below.
    w1_r = flat3x3(w1, Cin_p, Cmid_p)                                   # (Cmid_p, 9*Cin_p)
    ws_pad = jnp.pad(ws, ((0, Cin_p - Cin), (0, Cout_p - Cout))).T      # (Cout_p, Cin_p)
    ws_emb = jnp.zeros((Cout_p, 9 * Cin_p), jnp.float32)
    ws_emb = ws_emb.at[:, 4 * Cin_p:5 * Cin_p].set(ws_pad)
    wc = jnp.concatenate([w1_r, ws_emb], axis=0)                        # (Cmid_p+Cout_p, 9*Cin_p)
    gc = jnp.concatenate([padvec(g1, Cmid_p), padvec(gs, Cout_p)], axis=0)
    bc = jnp.concatenate([padvec(b1, Cmid_p), padvec(bs, Cout_p)], axis=0)

    w2_r = flat3x3(w2, Cmid_p, Cout_p)
    g2c, b2c = padvec(g2, Cout_p), padvec(b2, Cout_p)

    def full_spec(shape):
        return pl.BlockSpec(shape, lambda n, _nd=len(shape): (0,) * _nd)

    grid_spec = pltpu.PrefetchScalarGridSpec(
        num_scalar_prefetch=0,
        grid=(N,),
        in_specs=[
            pl.BlockSpec((1, Cin_p, S), lambda n: (n, 0, 0)),
            full_spec(wc.shape), full_spec(gc.shape), full_spec(bc.shape),
            full_spec(w2_r.shape), full_spec(g2c.shape), full_spec(b2c.shape),
        ],
        out_specs=pl.BlockSpec((1, Cout_p, S), lambda n: (n, 0, 0)),
    )
    out = pl.pallas_call(
        functools.partial(ublock_kernel, H=H, W=W, Cmid_p=Cmid_p),
        out_shape=jax.ShapeDtypeStruct((N, Cout_p, S), x_nchw.dtype),
        grid_spec=grid_spec,
        compiler_params=pltpu.CompilerParams(dimension_semantics=("parallel",)),
    )(x_flat, wc, gc, bc, w2_r, g2c, b2c)
    return out[:, :Cout, :].reshape(N, Cout, H, W)


def ref_forward(x, params):
    """Pure-JAX NCHW reference of UBlock.forward (stride=1, instancenorm, Identity)."""
    w1, g1, b1, w2, g2, b2, ws, gs, bs = params
    dn = ('NCHW', 'HWIO', 'NCHW')
    hp = lax.Precision.HIGHEST

    def inorm(y, g, b):
        mean = jnp.mean(y, axis=(2, 3), keepdims=True)
        var = jnp.mean((y - mean) ** 2, axis=(2, 3), keepdims=True)
        return ((y - mean) * lax.rsqrt(var + EPS) * g[None, :, None, None]
                + b[None, :, None, None])

    o = lax.conv_general_dilated(x, w1, (1, 1), ((1, 1), (1, 1)),
                                 dimension_numbers=dn, precision=hp)
    o = jnp.maximum(inorm(o, g1, b1), 0.0)
    o = lax.conv_general_dilated(o, w2, (1, 1), ((1, 1), (1, 1)),
                                 dimension_numbers=dn, precision=hp)
    o = inorm(o, g2, b2)
    s = lax.conv_general_dilated(x, ws[None, None], (1, 1), ((0, 0), (0, 0)),
                                 dimension_numbers=dn, precision=hp)
    s = inorm(s, gs, bs)
    return jnp.maximum(o + s, 0.0)


if __name__ == "__main__":
    key = jax.random.PRNGKey(0)
    N, H, W = 2, 16, 16
    in_planes, planes = 4, 8   # stride=1, in_planes != planes -> conv shortcut branch active
    ks = jax.random.split(key, 10)

    # PyTorch-style NCHW input (kernel works natively in this layout).
    x_nchw = jax.random.normal(ks[0], (N, in_planes, H, W), jnp.float32)

    # Deterministic synthetic parameters (conv weights HWIO; GroupNorm affine params).
    w1 = 0.2 * jax.random.normal(ks[1], (3, 3, in_planes, planes), jnp.float32)
    g1 = 1.0 + 0.1 * jax.random.normal(ks[2], (planes,), jnp.float32)
    b1 = 0.1 * jax.random.normal(ks[3], (planes,), jnp.float32)
    w2 = 0.2 * jax.random.normal(ks[4], (3, 3, planes, planes), jnp.float32)
    g2 = 1.0 + 0.1 * jax.random.normal(ks[5], (planes,), jnp.float32)
    b2 = 0.1 * jax.random.normal(ks[6], (planes,), jnp.float32)
    ws = 0.2 * jax.random.normal(ks[7], (in_planes, planes), jnp.float32)   # 1x1 shortcut conv
    gs = 1.0 + 0.1 * jax.random.normal(ks[8], (planes,), jnp.float32)
    bs = 0.1 * jax.random.normal(ks[9], (planes,), jnp.float32)
    params = (w1, g1, b1, w2, g2, b2, ws, gs, bs)

    out = jax.block_until_ready(ublock_forward(x_nchw, params))
    ref = jax.block_until_ready(ref_forward(x_nchw, params))

    assert out.shape == (N, planes, H, W), out.shape
    max_err = float(jnp.max(jnp.abs(out - ref)))
    assert jnp.allclose(out, ref, atol=2e-3, rtol=2e-3), f"max abs err {max_err}"
    print("KERNEL_OK")
</pallas_src>

<mosaic_0001>
module attributes {stable_mosaic.version = 11 : i64} {
  func.func @ublock_kernel(%arg0: i32, %arg1: memref<1x8x256xf32, #tpu.memory_space<vmem>>, %arg2: memref<16x72xf32, #tpu.memory_space<vmem>>, %arg3: memref<16x1xf32, #tpu.memory_space<vmem>>, %arg4: memref<16x1xf32, #tpu.memory_space<vmem>>, %arg5: memref<8x72xf32, #tpu.memory_space<vmem>>, %arg6: memref<8x1xf32, #tpu.memory_space<vmem>>, %arg7: memref<8x1xf32, #tpu.memory_space<vmem>>, %arg8: memref<1x8x256xf32, #tpu.memory_space<vmem>>) attributes {dimension_semantics = [#tpu.dimension_semantics<parallel>], iteration_bounds = array<i64: 2>, scalar_prefetch = 0 : i64, scratch_operands = 0 : i64, tpu.core_type = #tpu.core_type<tc>, window_params = [{transform_indices = @transform_0, window_bounds = array<i64: 1, 8, 256>}, {pipeline_mode = #tpu.pipeline_mode<synchronous>, transform_indices = @transform_1, window_bounds = array<i64: 16, 72>}, {pipeline_mode = #tpu.pipeline_mode<synchronous>, transform_indices = @transform_2, window_bounds = array<i64: 16, 1>}, {pipeline_mode = #tpu.pipeline_mode<synchronous>, transform_indices = @transform_3, window_bounds = array<i64: 16, 1>}, {pipeline_mode = #tpu.pipeline_mode<synchronous>, transform_indices = @transform_4, window_bounds = array<i64: 8, 72>}, {pipeline_mode = #tpu.pipeline_mode<synchronous>, transform_indices = @transform_5, window_bounds = array<i64: 8, 1>}, {pipeline_mode = #tpu.pipeline_mode<synchronous>, transform_indices = @transform_6, window_bounds = array<i64: 8, 1>}, {transform_indices = @transform_7, window_bounds = array<i64: 1, 8, 256>}]} {
    %c0 = arith.constant 0 : index
    %c0_0 = arith.constant 0 : index
    %c0_1 = arith.constant 0 : index
    %0 = vector.load %arg1[%c0, %c0_0, %c0_1] : memref<1x8x256xf32, #tpu.memory_space<vmem>>, vector<1x8x256xf32>
    %1 = vector.shape_cast %0 : vector<1x8x256xf32> to vector<8x256xf32>
    %2 = tpu.iota {dimensions = array<i32: 1>} : vector<1x256xi32>
    %c15_i32 = arith.constant 15 : i32
    %3 = vector.broadcast %c15_i32 : i32 to vector<1x256xi32>
    %4 = arith.andi %2, %3 : vector<1x256xi32>
    %c16_i32 = arith.constant 16 : i32
    %5 = vector.broadcast %c16_i32 : i32 to vector<1x256xi32>
    %6 = arith.cmpi sge, %2, %5 : vector<1x256xi32>
    %c240_i32 = arith.constant 240 : i32
    %7 = vector.broadcast %c240_i32 : i32 to vector<1x256xi32>
    %8 = arith.cmpi slt, %2, %7 : vector<1x256xi32>
    %c1_i32 = arith.constant 1 : i32
    %9 = vector.broadcast %c1_i32 : i32 to vector<1x256xi32>
    %10 = arith.cmpi sge, %4, %9 : vector<1x256xi32>
    %c14_i32 = arith.constant 14 : i32
    %11 = vector.broadcast %c14_i32 : i32 to vector<1x256xi32>
    %12 = arith.cmpi sle, %4, %11 : vector<1x256xi32>
    %13 = arith.andi %6, %10 : vector<1x256xi1>
    %14 = arith.andi %6, %12 : vector<1x256xi1>
    %15 = arith.andi %8, %10 : vector<1x256xi1>
    %16 = arith.andi %8, %12 : vector<1x256xi1>
    %c0_2 = arith.constant 0 : index
    %c0_3 = arith.constant 0 : index
    %17 = vector.load %arg2[%c0_2, %c0_3] : memref<16x72xf32, #tpu.memory_space<vmem>>, vector<16x72xf32>
    %c17_i32 = arith.constant 17 : i32
    %18 = tpu.dynamic_rotate %1 by %c17_i32 dim 1 : vector<8x256xf32>, i32 -> vector<8x256xf32>
    %cst = arith.constant 0.000000e+00 : f32
    %19 = vector.shape_cast %13 : vector<1x256xi1> to vector<1x256xi1>
    %20 = vector.broadcast %19 : vector<1x256xi1> to vector<8x256xi1>
    %21 = vector.broadcast %cst : f32 to vector<8x256xf32>
    %22 = arith.select %20, %18, %21 : vector<8x256xi1>, vector<8x256xf32>
    %c16_i32_4 = arith.constant 16 : i32
    %23 = tpu.dynamic_rotate %1 by %c16_i32_4 dim 1 : vector<8x256xf32>, i32 -> vector<8x256xf32>
    %cst_5 = arith.constant 0.000000e+00 : f32
    %24 = vector.shape_cast %6 : vector<1x256xi1> to vector<1x256xi1>
    %25 = vector.broadcast %24 : vector<1x256xi1> to vector<8x256xi1>
    %26 = vector.broadcast %cst_5 : f32 to vector<8x256xf32>
    %27 = arith.select %25, %23, %26 : vector<8x256xi1>, vector<8x256xf32>
    %c15_i32_6 = arith.constant 15 : i32
    %28 = tpu.dynamic_rotate %1 by %c15_i32_6 dim 1 : vector<8x256xf32>, i32 -> vector<8x256xf32>
    %cst_7 = arith.constant 0.000000e+00 : f32
    %29 = vector.shape_cast %14 : vector<1x256xi1> to vector<1x256xi1>
    %30 = vector.broadcast %29 : vector<1x256xi1> to vector<8x256xi1>
    %31 = vector.broadcast %cst_7 : f32 to vector<8x256xf32>
    %32 = arith.select %30, %28, %31 : vector<8x256xi1>, vector<8x256xf32>
    %c1_i32_8 = arith.constant 1 : i32
    %33 = tpu.dynamic_rotate %1 by %c1_i32_8 dim 1 : vector<8x256xf32>, i32 -> vector<8x256xf32>
    %cst_9 = arith.constant 0.000000e+00 : f32
    %34 = vector.shape_cast %10 : vector<1x256xi1> to vector<1x256xi1>
    %35 = vector.broadcast %34 : vector<1x256xi1> to vector<8x256xi1>
    %36 = vector.broadcast %cst_9 : f32 to vector<8x256xf32>
    %37 = arith.select %35, %33, %36 : vector<8x256xi1>, vector<8x256xf32>
    %c255_i32 = arith.constant 255 : i32
    %38 = tpu.dynamic_rotate %1 by %c255_i32 dim 1 : vector<8x256xf32>, i32 -> vector<8x256xf32>
    %cst_10 = arith.constant 0.000000e+00 : f32
    %39 = vector.shape_cast %12 : vector<1x256xi1> to vector<1x256xi1>
    %40 = vector.broadcast %39 : vector<1x256xi1> to vector<8x256xi1>
    %41 = vector.broadcast %cst_10 : f32 to vector<8x256xf32>
    %42 = arith.select %40, %38, %41 : vector<8x256xi1>, vector<8x256xf32>
    %c241_i32 = arith.constant 241 : i32
    %43 = tpu.dynamic_rotate %1 by %c241_i32 dim 1 : vector<8x256xf32>, i32 -> vector<8x256xf32>
    %cst_11 = arith.constant 0.000000e+00 : f32
    %44 = vector.shape_cast %15 : vector<1x256xi1> to vector<1x256xi1>
    %45 = vector.broadcast %44 : vector<1x256xi1> to vector<8x256xi1>
    %46 = vector.broadcast %cst_11 : f32 to vector<8x256xf32>
    %47 = arith.select %45, %43, %46 : vector<8x256xi1>, vector<8x256xf32>
    %c240_i32_12 = arith.constant 240 : i32
    %48 = tpu.dynamic_rotate %1 by %c240_i32_12 dim 1 : vector<8x256xf32>, i32 -> vector<8x256xf32>
    %cst_13 = arith.constant 0.000000e+00 : f32
    %49 = vector.shape_cast %8 : vector<1x256xi1> to vector<1x256xi1>
    %50 = vector.broadcast %49 : vector<1x256xi1> to vector<8x256xi1>
    %51 = vector.broadcast %cst_13 : f32 to vector<8x256xf32>
    %52 = arith.select %50, %48, %51 : vector<8x256xi1>, vector<8x256xf32>
    %c239_i32 = arith.constant 239 : i32
    %53 = tpu.dynamic_rotate %1 by %c239_i32 dim 1 : vector<8x256xf32>, i32 -> vector<8x256xf32>
    %cst_14 = arith.constant 0.000000e+00 : f32
    %54 = vector.shape_cast %16 : vector<1x256xi1> to vector<1x256xi1>
    %55 = vector.broadcast %54 : vector<1x256xi1> to vector<8x256xi1>
    %56 = vector.broadcast %cst_14 : f32 to vector<8x256xf32>
    %57 = arith.select %55, %53, %56 : vector<8x256xi1>, vector<8x256xf32>
    %58 = tpu.concatenate %22, %27, %32, %37, %1, %42, %47, %52, %57 in 0 : vector<8x256xf32>, vector<8x256xf32>, vector<8x256xf32>, vector<8x256xf32>, vector<8x256xf32>, vector<8x256xf32>, vector<8x256xf32>, vector<8x256xf32>, vector<8x256xf32> -> vector<72x256xf32>
    %cst_15 = arith.constant dense<0.000000e+00> : vector<16x256xf32>
    %59 = tpu.matmul %17, %58, %cst_15 {dimension_numbers = #tpu.dot_dimension_numbers<[1], [0], [0], [1], [0, 0, 1, 1], [], []>} : vector<16x72xf32>, vector<72x256xf32>, vector<16x256xf32> -> vector<16x256xf32>
    %c0_16 = arith.constant 0 : index
    %c0_17 = arith.constant 0 : index
    %60 = vector.load %arg3[%c0_16, %c0_17] : memref<16x1xf32, #tpu.memory_space<vmem>>, vector<16x1xf32>
    %c0_18 = arith.constant 0 : index
    %c0_19 = arith.constant 0 : index
    %61 = vector.load %arg4[%c0_18, %c0_19] : memref<16x1xf32, #tpu.memory_space<vmem>>, vector<16x1xf32>
    %cst_20 = arith.constant dense<0.000000e+00> : vector<16xf32>
    %62 = vector.multi_reduction <add>, %59, %cst_20 [1] : vector<16x256xf32> to vector<16xf32>
    %63 = vector.shape_cast %62 : vector<16xf32> to vector<16x1xf32>
    %cst_21 = arith.constant 2.560000e+02 : f32
    %64 = vector.broadcast %cst_21 : f32 to vector<16x1xf32>
    %65 = arith.divf %63, %64 : vector<16x1xf32>
    %66 = vector.broadcast %65 : vector<16x1xf32> to vector<16x256xf32>
    %67 = arith.subf %59, %66 : vector<16x256xf32>
    %68 = arith.mulf %67, %67 : vector<16x256xf32>
    %cst_22 = arith.constant dense<0.000000e+00> : vector<16xf32>
    %69 = vector.multi_reduction <add>, %68, %cst_22 [1] : vector<16x256xf32> to vector<16xf32>
    %70 = vector.shape_cast %69 : vector<16xf32> to vector<16x1xf32>
    %cst_23 = arith.constant 2.560000e+02 : f32
    %71 = vector.broadcast %cst_23 : f32 to vector<16x1xf32>
    %72 = arith.divf %70, %71 : vector<16x1xf32>
    %cst_24 = arith.constant 9.99999974E-6 : f32
    %73 = vector.broadcast %cst_24 : f32 to vector<16x1xf32>
    %74 = arith.addf %72, %73 : vector<16x1xf32>
    %75 = math.rsqrt %74 : vector<16x1xf32>
    %76 = vector.broadcast %75 : vector<16x1xf32> to vector<16x256xf32>
    %77 = arith.mulf %67, %76 : vector<16x256xf32>
    %78 = vector.broadcast %60 : vector<16x1xf32> to vector<16x256xf32>
    %79 = arith.mulf %77, %78 : vector<16x256xf32>
    %80 = vector.broadcast %61 : vector<16x1xf32> to vector<16x256xf32>
    %81 = arith.addf %79, %80 : vector<16x256xf32>
    %82 = vector.extract_strided_slice %81 {offsets = [0, 0], sizes = [8, 256], strides = [1, 1]} : vector<16x256xf32> to vector<8x256xf32>
    %cst_25 = arith.constant 0.000000e+00 : f32
    %83 = vector.broadcast %cst_25 : f32 to vector<8x256xf32>
    %84 = arith.maximumf %82, %83 : vector<8x256xf32>
    %85 = vector.extract_strided_slice %81 {offsets = [8, 0], sizes = [8, 256], strides = [1, 1]} : vector<16x256xf32> to vector<8x256xf32>
    %c0_26 = arith.constant 0 : index
    %c0_27 = arith.constant 0 : index
    %86 = vector.load %arg5[%c0_26, %c0_27] : memref<8x72xf32, #tpu.memory_space<vmem>>, vector<8x72xf32>
    %c17_i32_28 = arith.constant 17 : i32
    %87 = tpu.dynamic_rotate %84 by %c17_i32_28 dim 1 : vector<8x256xf32>, i32 -> vector<8x256xf32>
    %cst_29 = arith.constant 0.000000e+00 : f32
    %88 = vector.shape_cast %13 : vector<1x256xi1> to vector<1x256xi1>
    %89 = vector.broadcast %88 : vector<1x256xi1> to vector<8x256xi1>
    %90 = vector.broadcast %cst_29 : f32 to vector<8x256xf32>
    %91 = arith.select %89, %87, %90 : vector<8x256xi1>, vector<8x256xf32>
    %c16_i32_30 = arith.constant 16 : i32
    %92 = tpu.dynamic_rotate %84 by %c16_i32_30 dim 1 : vector<8x256xf32>, i32 -> vector<8x256xf32>
    %cst_31 = arith.constant 0.000000e+00 : f32
    %93 = vector.shape_cast %6 : vector<1x256xi1> to vector<1x256xi1>
    %94 = vector.broadcast %93 : vector<1x256xi1> to vector<8x256xi1>
    %95 = vector.broadcast %cst_31 : f32 to vector<8x256xf32>
    %96 = arith.select %94, %92, %95 : vector<8x256xi1>, vector<8x256xf32>
    %c15_i32_32 = arith.constant 15 : i32
    %97 = tpu.dynamic_rotate %84 by %c15_i32_32 dim 1 : vector<8x256xf32>, i32 -> vector<8x256xf32>
    %cst_33 = arith.constant 0.000000e+00 : f32
    %98 = vector.shape_cast %14 : vector<1x256xi1> to vector<1x256xi1>
    %99 = vector.broadcast %98 : vector<1x256xi1> to vector<8x256xi1>
    %100 = vector.broadcast %cst_33 : f32 to vector<8x256xf32>
    %101 = arith.select %99, %97, %100 : vector<8x256xi1>, vector<8x256xf32>
    %c1_i32_34 = arith.constant 1 : i32
    %102 = tpu.dynamic_rotate %84 by %c1_i32_34 dim 1 : vector<8x256xf32>, i32 -> vector<8x256xf32>
    %cst_35 = arith.constant 0.000000e+00 : f32
    %103 = vector.shape_cast %10 : vector<1x256xi1> to vector<1x256xi1>
    %104 = vector.broadcast %103 : vector<1x256xi1> to vector<8x256xi1>
    %105 = vector.broadcast %cst_35 : f32 to vector<8x256xf32>
    %106 = arith.select %104, %102, %105 : vector<8x256xi1>, vector<8x256xf32>
    %c255_i32_36 = arith.constant 255 : i32
    %107 = tpu.dynamic_rotate %84 by %c255_i32_36 dim 1 : vector<8x256xf32>, i32 -> vector<8x256xf32>
    %cst_37 = arith.constant 0.000000e+00 : f32
    %108 = vector.shape_cast %12 : vector<1x256xi1> to vector<1x256xi1>
    %109 = vector.broadcast %108 : vector<1x256xi1> to vector<8x256xi1>
    %110 = vector.broadcast %cst_37 : f32 to vector<8x256xf32>
    %111 = arith.select %109, %107, %110 : vector<8x256xi1>, vector<8x256xf32>
    %c241_i32_38 = arith.constant 241 : i32
    %112 = tpu.dynamic_rotate %84 by %c241_i32_38 dim 1 : vector<8x256xf32>, i32 -> vector<8x256xf32>
    %cst_39 = arith.constant 0.000000e+00 : f32
    %113 = vector.shape_cast %15 : vector<1x256xi1> to vector<1x256xi1>
    %114 = vector.broadcast %113 : vector<1x256xi1> to vector<8x256xi1>
    %115 = vector.broadcast %cst_39 : f32 to vector<8x256xf32>
    %116 = arith.select %114, %112, %115 : vector<8x256xi1>, vector<8x256xf32>
    %c240_i32_40 = arith.constant 240 : i32
    %117 = tpu.dynamic_rotate %84 by %c240_i32_40 dim 1 : vector<8x256xf32>, i32 -> vector<8x256xf32>
    %cst_41 = arith.constant 0.000000e+00 : f32
    %118 = vector.shape_cast %8 : vector<1x256xi1> to vector<1x256xi1>
    %119 = vector.broadcast %118 : vector<1x256xi1> to vector<8x256xi1>
    %120 = vector.broadcast %cst_41 : f32 to vector<8x256xf32>
    %121 = arith.select %119, %117, %120 : vector<8x256xi1>, vector<8x256xf32>
    %c239_i32_42 = arith.constant 239 : i32
    %122 = tpu.dynamic_rotate %84 by %c239_i32_42 dim 1 : vector<8x256xf32>, i32 -> vector<8x256xf32>
    %cst_43 = arith.constant 0.000000e+00 : f32
    %123 = vector.shape_cast %16 : vector<1x256xi1> to vector<1x256xi1>
    %124 = vector.broadcast %123 : vector<1x256xi1> to vector<8x256xi1>
    %125 = vector.broadcast %cst_43 : f32 to vector<8x256xf32>
    %126 = arith.select %124, %122, %125 : vector<8x256xi1>, vector<8x256xf32>
    %127 = tpu.concatenate %91, %96, %101, %106, %84, %111, %116, %121, %126 in 0 : vector<8x256xf32>, vector<8x256xf32>, vector<8x256xf32>, vector<8x256xf32>, vector<8x256xf32>, vector<8x256xf32>, vector<8x256xf32>, vector<8x256xf32>, vector<8x256xf32> -> vector<72x256xf32>
    %cst_44 = arith.constant dense<0.000000e+00> : vector<8x256xf32>
    %128 = tpu.matmul %86, %127, %cst_44 {dimension_numbers = #tpu.dot_dimension_numbers<[1], [0], [0], [1], [0, 0, 1, 1], [], []>} : vector<8x72xf32>, vector<72x256xf32>, vector<8x256xf32> -> vector<8x256xf32>
    %c0_45 = arith.constant 0 : index
    %c0_46 = arith.constant 0 : index
    %129 = vector.load %arg6[%c0_45, %c0_46] : memref<8x1xf32, #tpu.memory_space<vmem>>, vector<8x1xf32>
    %c0_47 = arith.constant 0 : index
    %c0_48 = arith.constant 0 : index
    %130 = vector.load %arg7[%c0_47, %c0_48] : memref<8x1xf32, #tpu.memory_space<vmem>>, vector<8x1xf32>
    %cst_49 = arith.constant dense<0.000000e+00> : vector<8xf32>
    %131 = vector.multi_reduction <add>, %128, %cst_49 [1] : vector<8x256xf32> to vector<8xf32>
    %132 = vector.shape_cast %131 : vector<8xf32> to vector<8x1xf32>
    %cst_50 = arith.constant 2.560000e+02 : f32
    %133 = vector.broadcast %cst_50 : f32 to vector<8x1xf32>
    %134 = arith.divf %132, %133 : vector<8x1xf32>
    %135 = vector.broadcast %134 : vector<8x1xf32> to vector<8x256xf32>
    %136 = arith.subf %128, %135 : vector<8x256xf32>
    %137 = arith.mulf %136, %136 : vector<8x256xf32>
    %cst_51 = arith.constant dense<0.000000e+00> : vector<8xf32>
    %138 = vector.multi_reduction <add>, %137, %cst_51 [1] : vector<8x256xf32> to vector<8xf32>
    %139 = vector.shape_cast %138 : vector<8xf32> to vector<8x1xf32>
    %cst_52 = arith.constant 2.560000e+02 : f32
    %140 = vector.broadcast %cst_52 : f32 to vector<8x1xf32>
    %141 = arith.divf %139, %140 : vector<8x1xf32>
    %cst_53 = arith.constant 9.99999974E-6 : f32
    %142 = vector.broadcast %cst_53 : f32 to vector<8x1xf32>
    %143 = arith.addf %141, %142 : vector<8x1xf32>
    %144 = math.rsqrt %143 : vector<8x1xf32>
    %145 = vector.broadcast %144 : vector<8x1xf32> to vector<8x256xf32>
    %146 = arith.mulf %136, %145 : vector<8x256xf32>
    %147 = vector.broadcast %129 : vector<8x1xf32> to vector<8x256xf32>
    %148 = arith.mulf %146, %147 : vector<8x256xf32>
    %149 = vector.broadcast %130 : vector<8x1xf32> to vector<8x256xf32>
    %150 = arith.addf %148, %149 : vector<8x256xf32>
    %151 = arith.addf %150, %85 : vector<8x256xf32>
    %cst_54 = arith.constant 0.000000e+00 : f32
    %152 = vector.broadcast %cst_54 : f32 to vector<8x256xf32>
    %153 = arith.maximumf %151, %152 : vector<8x256xf32>
    %c0_55 = arith.constant 0 : index
    %c0_56 = arith.constant 0 : index
    %c0_57 = arith.constant 0 : index
    %154 = vector.load %arg8[%c0_55, %c0_56, %c0_57] : memref<1x8x256xf32, #tpu.memory_space<vmem>>, vector<1x8x256xf32>
    %155 = vector.shape_cast %154 : vector<1x8x256xf32> to vector<8x256xf32>
    %156 = vector.shape_cast %153 : vector<8x256xf32> to vector<1x8x256xf32>
    tpu.vector_store %arg8[%c0_55, %c0_56, %c0_57], %156 {strides = array<i32>} : memref<1x8x256xf32, #tpu.memory_space<vmem>>, vector<1x8x256xf32>,
    return
  }
  func.func @transform_0(%arg0: i32) -> (i32, i32, i32) {
    %c0_i32 = arith.constant 0 : i32
    %c0_i32_0 = arith.constant 0 : i32
    %c0_i32_1 = arith.constant 0 : i32
    return %arg0, %c0_i32, %c0_i32_0 : i32, i32, i32
  }
  func.func @transform_1(%arg0: i32) -> (i32, i32) {
    %c0_i32 = arith.constant 0 : i32
    %c0_i32_0 = arith.constant 0 : i32
    %c0_i32_1 = arith.constant 0 : i32
    return %c0_i32, %c0_i32_0 : i32, i32
  }
  func.func @transform_2(%arg0: i32) -> (i32, i32) {
    %c0_i32 = arith.constant 0 : i32
    %c0_i32_0 = arith.constant 0 : i32
    %c0_i32_1 = arith.constant 0 : i32
    return %c0_i32, %c0_i32_0 : i32, i32
  }
  func.func @transform_3(%arg0: i32) -> (i32, i32) {
    %c0_i32 = arith.constant 0 : i32
    %c0_i32_0 = arith.constant 0 : i32
    %c0_i32_1 = arith.constant 0 : i32
    return %c0_i32, %c0_i32_0 : i32, i32
  }
  func.func @transform_4(%arg0: i32) -> (i32, i32) {
    %c0_i32 = arith.constant 0 : i32
    %c0_i32_0 = arith.constant 0 : i32
    %c0_i32_1 = arith.constant 0 : i32
    return %c0_i32, %c0_i32_0 : i32, i32
  }
  func.func @transform_5(%arg0: i32) -> (i32, i32) {
    %c0_i32 = arith.constant 0 : i32
    %c0_i32_0 = arith.constant 0 : i32
    %c0_i32_1 = arith.constant 0 : i32
    return %c0_i32, %c0_i32_0 : i32, i32
  }
  func.func @transform_6(%arg0: i32) -> (i32, i32) {
    %c0_i32 = arith.constant 0 : i32
    %c0_i32_0 = arith.constant 0 : i32
    %c0_i32_1 = arith.constant 0 : i32
    return %c0_i32, %c0_i32_0 : i32, i32
  }
  func.func @transform_7(%arg0: i32) -> (i32, i32, i32) {
    %c0_i32 = arith.constant 0 : i32
    %c0_i32_0 = arith.constant 0 : i32
    %c0_i32_1 = arith.constant 0 : i32
    return %arg0, %c0_i32, %c0_i32_0 : i32, i32, i32
  }
}

</mosaic_0001>

<llo_original>
// kernel: tpu_custom_call.1
$region0: #{tpu_custom_call.1}
  #allocation0 [shape = 'u32[]', space=smem, size = 0x4, offset = 0x4, fixed_abs, tag = 'smem constant byte address 0x4 - core index']
  #allocation1 [shape = 'u32[144,128]{1,0:T(1,128)}', space=vmem, size = 0x12000, scoped, tag = 'internal scratch']
  %s0 = inlined_call_operand.vmem [shape: f32[2,8,256], index: 0, kind: input, shape index: {}]
  %s1 = inlined_call_operand.vmem [shape: f32[16,72], index: 1, kind: input, shape index: {}]
  %s2 = inlined_call_operand.vmem [shape: f32[16,1], index: 2, kind: input, shape index: {}]
  %s3 = inlined_call_operand.vmem [shape: f32[16,1], index: 3, kind: input, shape index: {}]
  %s4 = inlined_call_operand.vmem [shape: f32[8,72], index: 4, kind: input, shape index: {}]
  %s5 = inlined_call_operand.vmem [shape: f32[8,1], index: 5, kind: input, shape index: {}]
  %s6 = inlined_call_operand.vmem [shape: f32[8,1], index: 6, kind: input, shape index: {}]
  %s7 = inlined_call_operand.hbm [shape: f32[2,8,256], index: 7, kind: output, shape index: {}]
  %s8 = sld [smem:[#allocation0]]
  $region61: #{tpu_custom_call.1} parent=0
    _
  %s10 = ssub.s32 1, %s8
  %s11 = scalar_select 0, %s10, %s8
  $region1: #{tpu_custom_call.1} parent=0
    #allocation2 [shape = 'u8[16384]{0}', space=vmem, size = 0x4000, scoped, tag = 'output window, operand 0']
    #allocation3 [shape = 's32[2]{0}', space=sflag, size = 0x8, scoped, tag = 'scoped memory for tpu_custom_call.1']
    %12 = vsyncpa [#allocation3], 0
    %s13 = scalar_lea.sflag [#allocation3], 1
    %14 = vsyncpa %s13, 0
    loop: start=0, step=1, limit=4
    $region2: #{tpu_custom_call.1} parent=1 // loop_pre_header
      _
    $region3: #{tpu_custom_call.1} parent=1 // loop_header
      %s16 = sphi 0, %s20
      %p17 = scmp.ge.s32.totalorder %s16, 4
      %s26 = sphi 0, %s28
      %s29 = sphi 0, %s26
      %s30 = sphi 0, %s29
      %s46 = sphi 0, %s30
      %s50 = sphi 0, %s50
      %s52 = sphi 0, %s50
      %s53 = sphi 0, %s52
      %s67 = sphi 0, %s53
      %s71 = sphi 0, %s71
      %s73 = sphi 0, %s71
      %s74 = sphi 0, %s73
      %s88 = sphi 0, %s74
      %s92 = sphi 0, %s92
      %s94 = sphi 0, %s92
      %s95 = sphi 0, %s94
      %s109 = sphi 0, %s95
      %s113 = sphi 0, %s113
      %s115 = sphi 0, %s113
      %s116 = sphi 0, %s115
      %s130 = sphi 0, %s116
      %s134 = sphi 0, %s134
      %s136 = sphi 0, %s134
      %s137 = sphi 0, %s136
      %s151 = sphi 0, %s137
      %s155 = sphi 0, %s155
      %s157 = sphi 0, %s155
      %s158 = sphi 0, %s157
      %s172 = sphi 0, %s158
      %s178 = sphi 0, %s180
      %s181 = sphi 0, %s178
      %s182 = sphi 0, %s181
      %s198 = sphi 0, %s182
    $region4: #{tpu_custom_call.1} parent=1 // loop_header_branch
      %19 = sbr.rel (%p17) target = $region8
    $region5: #{tpu_custom_call.1} parent=1 // loop_body
      %s21 = ssub.s32 %s16, 1
      %s22 = ssub.s32 %s16, 2
      %s23 = sadd.s32 %s16, 1
      %s24 = ssub.s32 %s16, %s23
      %p25 = scmp.eq.s32.totalorder %s24, 0
      %s27 = sadd.s32 %s26, 1
      %s28 = scalar_select %p25, %s26, %s27
      %p31 = pneg %p25
      %p32 = scmp.eq.s32.totalorder %s16, 1
      %p33 = por %p31, %p32
      %p34 = scmp.ne.s32.totalorder %s26, %s29
      %p35 = scmp.eq.s32.totalorder %s16, 0
      %p36 = por %p34, %p35
      %p37 = scmp.ne.s32.totalorder %s26, %s29
      %p38 = scmp.eq.s32.totalorder %s21, 1
      %p39 = por %p37, %p38
      %p40 = scmp.ne.s32.totalorder %s29, %s30
      %p41 = scmp.eq.s32.totalorder %s21, 0
      %p42 = por %p40, %p41
      %p43 = scmp.ne.s32.totalorder %s29, %s30
      %p44 = scmp.eq.s32.totalorder %s22, 1
      %p45 = por %p43, %p44
      %p47 = scmp.ne.s32.totalorder %s30, %s46
      %p48 = scmp.eq.s32.totalorder %s22, 0
      %p49 = por %p47, %p48
      %s51 = sadd.s32 %s50, 1
      %p54 = scmp.eq.s32.totalorder %s16, 1
      %p55 = scmp.ne.s32.totalorder %s50, %s52
      %p56 = scmp.eq.s32.totalorder %s16, 0
      %p57 = por %p55, %p56
      %p58 = scmp.ne.s32.totalorder %s50, %s52
      %p59 = scmp.eq.s32.totalorder %s21, 1
      %p60 = por %p58, %p59
      %p61 = scmp.ne.s32.totalorder %s52, %s53
      %p62 = scmp.eq.s32.totalorder %s21, 0
      %p63 = por %p61, %p62
      %p64 = scmp.ne.s32.totalorder %s52, %s53
      %p65 = scmp.eq.s32.totalorder %s22, 1
      %p66 = por %p64, %p65
      %p68 = scmp.ne.s32.totalorder %s53, %s67
      %p69 = scmp.eq.s32.totalorder %s22, 0
      %p70 = por %p68, %p69
      %s72 = sadd.s32 %s71, 1
      %p75 = scmp.eq.s32.totalorder %s16, 1
      %p76 = scmp.ne.s32.totalorder %s71, %s73
      %p77 = scmp.eq.s32.totalorder %s16, 0
      %p78 = por %p76, %p77
      %p79 = scmp.ne.s32.totalorder %s71, %s73
      %p80 = scmp.eq.s32.totalorder %s21, 1
      %p81 = por %p79, %p80
      %p82 = scmp.ne.s32.totalorder %s73, %s74
      %p83 = scmp.eq.s32.totalorder %s21, 0
      %p84 = por %p82, %p83
      %p85 = scmp.ne.s32.totalorder %s73, %s74
      %p86 = scmp.eq.s32.totalorder %s22, 1
      %p87 = por %p85, %p86
      %p89 = scmp.ne.s32.totalorder %s74, %s88
      %p90 = scmp.eq.s32.totalorder %s22, 0
      %p91 = por %p89, %p90
      %s93 = sadd.s32 %s92, 1
      %p96 = scmp.eq.s32.totalorder %s16, 1
      %p97 = scmp.ne.s32.totalorder %s92, %s94
      %p98 = scmp.eq.s32.totalorder %s16, 0
      %p99 = por %p97, %p98
      %p100 = scmp.ne.s32.totalorder %s92, %s94
      %p101 = scmp.eq.s32.totalorder %s21, 1
      %p102 = por %p100, %p101
      %p103 = scmp.ne.s32.totalorder %s94, %s95
      %p104 = scmp.eq.s32.totalorder %s21, 0
      %p105 = por %p103, %p104
      %p106 = scmp.ne.s32.totalorder %s94, %s95
      %p107 = scmp.eq.s32.totalorder %s22, 1
      %p108 = por %p106, %p107
      %p110 = scmp.ne.s32.totalorder %s95, %s109
      %p111 = scmp.eq.s32.totalorder %s22, 0
      %p112 = por %p110, %p111
      %s114 = sadd.s32 %s113, 1
      %p117 = scmp.eq.s32.totalorder %s16, 1
      %p118 = scmp.ne.s32.totalorder %s113, %s115
      %p119 = scmp.eq.s32.totalorder %s16, 0
      %p120 = por %p118, %p119
      %p121 = scmp.ne.s32.totalorder %s113, %s115
      %p122 = scmp.eq.s32.totalorder %s21, 1
      %p123 = por %p121, %p122
      %p124 = scmp.ne.s32.totalorder %s115, %s116
      %p125 = scmp.eq.s32.totalorder %s21, 0
      %p126 = por %p124, %p125
      %p127 = scmp.ne.s32.totalorder %s115, %s116
      %p128 = scmp.eq.s32.totalorder %s22, 1
      %p129 = por %p127, %p128
      %p131 = scmp.ne.s32.totalorder %s116, %s130
      %p132 = scmp.eq.s32.totalorder %s22, 0
      %p133 = por %p131, %p132
      %s135 = sadd.s32 %s134, 1
      %p138 = scmp.eq.s32.totalorder %s16, 1
      %p139 = scmp.ne.s32.totalorder %s134, %s136
      %p140 = scmp.eq.s32.totalorder %s16, 0
      %p141 = por %p139, %p140
      %p142 = scmp.ne.s32.totalorder %s134, %s136
      %p143 = scmp.eq.s32.totalorder %s21, 1
      %p144 = por %p142, %p143
      %p145 = scmp.ne.s32.totalorder %s136, %s137
      %p146 = scmp.eq.s32.totalorder %s21, 0
      %p147 = por %p145, %p146
      %p148 = scmp.ne.s32.totalorder %s136, %s137
      %p149 = scmp.eq.s32.totalorder %s22, 1
      %p150 = por %p148, %p149
      %p152 = scmp.ne.s32.totalorder %s137, %s151
      %p153 = scmp.eq.s32.totalorder %s22, 0
      %p154 = por %p152, %p153
      %s156 = sadd.s32 %s155, 1
      %p159 = scmp.eq.s32.totalorder %s16, 1
      %p160 = scmp.ne.s32.totalorder %s155, %s157
      %p161 = scmp.eq.s32.totalorder %s16, 0
      %p162 = por %p160, %p161
      %p163 = scmp.ne.s32.totalorder %s155, %s157
      %p164 = scmp.eq.s32.totalorder %s21, 1
      %p165 = por %p163, %p164
      %p166 = scmp.ne.s32.totalorder %s157, %s158
      %p167 = scmp.eq.s32.totalorder %s21, 0
      %p168 = por %p166, %p167
      %p169 = scmp.ne.s32.totalorder %s157, %s158
      %p170 = scmp.eq.s32.totalorder %s22, 1
      %p171 = por %p169, %p170
      %p173 = scmp.ne.s32.totalorder %s158, %s172
      %p174 = scmp.eq.s32.totalorder %s22, 0
      %p175 = por %p173, %p174
      %s176 = ssub.s32 %s16, %s23
      %p177 = scmp.eq.s32.totalorder %s176, 0
      %s179 = sadd.s32 %s178, 1
      %s180 = scalar_select %p177, %s178, %s179
      %p183 = pneg %p177
      %p184 = scmp.eq.s32.totalorder %s16, 1
      %p185 = por %p183, %p184
      %p186 = scmp.ne.s32.totalorder %s178, %s181
      %p187 = scmp.eq.s32.totalorder %s16, 0
      %p188 = por %p186, %p187
      %p189 = scmp.ne.s32.totalorder %s178, %s181
      %p190 = scmp.eq.s32.totalorder %s21, 1
      %p191 = por %p189, %p190
      %p192 = scmp.ne.s32.totalorder %s181, %s182
      %p193 = scmp.eq.s32.totalorder %s21, 0
      %p194 = por %p192, %p193
      %p195 = scmp.ne.s32.totalorder %s181, %s182
      %p196 = scmp.eq.s32.totalorder %s22, 1
      %p197 = por %p195, %p196
      %p199 = scmp.ne.s32.totalorder %s182, %s198
      %p200 = scmp.eq.s32.totalorder %s22, 0
      %p201 = por %p199, %p200
      %p202 = scmp.le.s32.totalorder 1, %s16
      %p203 = scmp.lt.s32.totalorder %s16, 3
      %p204 = pnand %p202, %p203
      %p205 = pneg %p204
      // Predicated region
      $region9: #{tpu_custom_call.1} parent=5 // pred_check
        _
      $region10: #{tpu_custom_call.1} parent=5 // pred_check_branch
        %207 = sbr.rel (%p204) target = $region12
      $region11: #{tpu_custom_call.1} parent=5 // pred_region
        %s208 = ssub.s32 %s16, 1
        // Predicated region
        $region13: #{tpu_custom_call.1} parent=11 // pred_check
          %p209 = pneg %p63
        $region14: #{tpu_custom_call.1} parent=11 // pred_check_branch
          %211 = sbr.rel (%p209) target = $region16
        $region15: #{tpu_custom_call.1} parent=11 // pred_region
          _
        $region16: #{tpu_custom_call.1} parent=11 // pred_fallthru
          _
        // Predicated region
        $region17: #{tpu_custom_call.1} parent=11 // pred_check
          %p212 = pneg %p84
        $region18: #{tpu_custom_call.1} parent=11 // pred_check_branch
          %214 = sbr.rel (%p212) target = $region20
        $region19: #{tpu_custom_call.1} parent=11 // pred_region
          _
        $region20: #{tpu_custom_call.1} parent=11 // pred_fallthru
          _
        // Predicated region
        $region21: #{tpu_custom_call.1} parent=11 // pred_check
          %p215 = pneg %p105
        $region22: #{tpu_custom_call.1} parent=11 // pred_check_branch
          %217 = sbr.rel (%p215) target = $region24
        $region23: #{tpu_custom_call.1} parent=11 // pred_region
          _
        $region24: #{tpu_custom_call.1} parent=11 // pred_fallthru
          _
        // Predicated region
        $region25: #{tpu_custom_call.1} parent=11 // pred_check
          %p218 = pneg %p126
        $region26: #{tpu_custom_call.1} parent=11 // pred_check_branch
          %220 = sbr.rel (%p218) target = $region28
        $region27: #{tpu_custom_call.1} parent=11 // pred_region
          _
        $region28: #{tpu_custom_call.1} parent=11 // pred_fallthru
          _
        // Predicated region
        $region29: #{tpu_custom_call.1} parent=11 // pred_check
          %p221 = pneg %p147
        $region30: #{tpu_custom_call.1} parent=11 // pred_check_branch
          %223 = sbr.rel (%p221) target = $region32
        $region31: #{tpu_custom_call.1} parent=11 // pred_region
          _
        $region32: #{tpu_custom_call.1} parent=11 // pred_fallthru
          _
        // Predicated region
        $region33: #{tpu_custom_call.1} parent=11 // pred_check
          %p224 = pneg %p168
        $region34: #{tpu_custom_call.1} parent=11 // pred_check_branch
          %226 = sbr.rel (%p224) target = $region36
        $region35: #{tpu_custom_call.1} parent=11 // pred_region
          _
        $region36: #{tpu_custom_call.1} parent=11 // pred_fallthru
          _
      $region12: #{tpu_custom_call.1} parent=5 // pred_fallthru
        _
      %p227 = scmp.lt.s32.totalorder %s16, 2
      // Predicated region
      $region37: #{tpu_custom_call.1} parent=5 // pred_check
        %p228 = pneg %p227
      $region38: #{tpu_custom_call.1} parent=5 // pred_check_branch
        %230 = sbr.rel (%p228) target = $region40
      $region39: #{tpu_custom_call.1} parent=5 // pred_region
        // Predicated region
        $region41: #{tpu_custom_call.1} parent=39 // pred_check
          %p231 = pneg %p36
        $region42: #{tpu_custom_call.1} parent=39 // pred_check_branch
          %233 = sbr.rel (%p231) target = $region44
        $region43: #{tpu_custom_call.1} parent=39 // pred_region
          %p234 = scmp.lt.s32.totalorder %s16, 1
          %s235 = scalar_select %p234, %s16, 1
          %s236 = smul.addr %s235, 2
          %s237 = smul.addr %s236, 8
          %s238 = scalar_lea.vmem %s0, %s237
        $region44: #{tpu_custom_call.1} parent=39 // pred_fallthru
          _
      $region40: #{tpu_custom_call.1} parent=5 // pred_fallthru
        _
      %p239 = scmp.le.s32.totalorder 1, %s16
      %p240 = scmp.lt.s32.totalorder %s16, 3
      %p241 = pnand %p239, %p240
      %p242 = pneg %p241
      // Predicated region
      $region45: #{tpu_custom_call.1} parent=5 // pred_check
        _
      $region46: #{tpu_custom_call.1} parent=5 // pred_check_branch
        %244 = sbr.rel (%p241) target = $region48
      $region47: #{tpu_custom_call.1} parent=5 // pred_region
        %s245 = ssub.s32 %s16, 1
        %p246 = scmp.lt.s32.totalorder %s21, 1
        %s247 = scalar_select %p246, %s21, 1
        %s248 = smul.addr %s247, 2
        %s249 = smul.addr %s248, 8
        %s250 = scalar_lea.vmem %s0, %s249
        %p251 = pneg %p42
        %p252 = pneg %p39
        %p253 = pneg %p63
        %p254 = pneg %p60
        %p255 = pneg %p84
        %p256 = pneg %p81
        %p257 = pneg %p105
        %p258 = pneg %p102
        %p259 = pneg %p126
        %p260 = pneg %p123
        %p261 = pneg %p147
        %p262 = pneg %p144
        %p263 = pneg %p168
        %p264 = pneg %p165
        %p265 = pneg %p194
        %p266 = pneg %p191
        %s267 = sand.u32 %s181, 1
        %s268 = scalar_lea.sflag [#allocation3], %s267
        %s269 = sand.u32 %s181, 1
        %s270 = smul.addr %s269, 16
        %s271 = scalar_lea.vmem [#allocation2], %s270
        %p272 = scmp.lt.s32.totalorder %s21, 1
        %s273 = scalar_select %p272, %s21, 1
        %s274 = smul.addr %s273, 2
        %s275 = smul.addr %s274, 8
        %s276 = scalar_lea.vmem %s0, %s275
        %v277 = vld [vmem:[%s276] sm:$0xff]
        %v278 = vld [vmem:[%s276 + $0x8] sm:$0xff]
        %v279 = vlaneseq
        %v280 = vand.u32 %v279, 127
        %v281 = vadd.s32 %v280, 128
        %v282 = vand.u32 %v280, 15
        %v283 = vand.u32 %v281, 15
        %vm284 = vcmp.ge.s32.totalorder %v280, 16
        %vm285 = vcmp.ge.s32.totalorder %v281, 16
        %vm286 = vcmp.lt.s32.totalorder %v280, 240
        %vm287 = vcmp.lt.s32.totalorder %v281, 240
        %vm288 = vcmp.ge.s32.totalorder %v282, 1
        %vm289 = vcmp.ge.s32.totalorder %v283, 1
        %vm290 = vcmp.le.s32.totalorder %v282, 14
        %vm291 = vcmp.le.s32.totalorder %v283, 14
        %vm292 = vmand %vm284, %vm288
        %vm293 = vmand %vm285, %vm289
        %vm294 = vmand %vm284, %vm290
        %vm295 = vmand %vm285, %vm291
        %vm296 = vmand %vm286, %vm288
        %vm297 = vmand %vm287, %vm289
        %vm298 = vmand %vm286, %vm290
        %vm299 = vmand %vm287, %vm291
        %v300 = vld [vmem:[%s1] sm:$0xff]
        %v301 = vld [vmem:[%s1 + $0x8] sm:$0xff]
        %302 = vrot.lane.b32.xlu0 %v277, 17
        %v303 = vpop.permute.xlu0 %302
        %304 = vrot.lane.b32.xlu0 %v278, 17
        %v305 = vpop.permute.xlu0 %304
        %vm306 = vcmp.lt.s32.totalorder %v280, 17
        %v307 = vsel %vm306, %v303, %v305
        %v308 = vsel %vm306, %v305, %v303
        %v309 = vsel %vm292, 1, 0
        %v310 = vsel %vm293, 1, 0
        %vm311 = vcmp.eq.s32.totalorder %v309, 1
        %vm312 = vcmp.eq.s32.totalorder %v310, 1
        %v313 = vsel %vm311, %v308, 0.0
        %v314 = vsel %vm312, %v307, 0.0
        %315 = vrot.lane.b32.xlu0 %v277, 16
        %v316 = vpop.permute.xlu0 %315
        %317 = vrot.lane.b32.xlu0 %v278, 16
        %v318 = vpop.permute.xlu0 %317
        %vm319 = vcmp.lt.s32.totalorder %v280, 16
        %v320 = vsel %vm319, %v316, %v318
        %v321 = vsel %vm319, %v318, %v316
        %v322 = vsel %vm284, 1, 0
        %v323 = vsel %vm285, 1, 0
        %vm324 = vcmp.eq.s32.totalorder %v322, 1
        %vm325 = vcmp.eq.s32.totalorder %v323, 1
        %v326 = vsel %vm324, %v321, 0.0
        %v327 = vsel %vm325, %v320, 0.0
        %328 = vrot.lane.b32.xlu0 %v277, 15
        %v329 = vpop.permute.xlu0 %328
        %330 = vrot.lane.b32.xlu0 %v278, 15
        %v331 = vpop.permute.xlu0 %330
        %vm332 = vcmp.lt.s32.totalorder %v280, 15
        %v333 = vsel %vm332, %v329, %v331
        %v334 = vsel %vm332, %v331, %v329
        %v335 = vsel %vm294, 1, 0
        %v336 = vsel %vm295, 1, 0
        %vm337 = vcmp.eq.s32.totalorder %v335, 1
        %vm338 = vcmp.eq.s32.totalorder %v336, 1
        %v339 = vsel %vm337, %v334, 0.0
        %v340 = vsel %vm338, %v333, 0.0
        %341 = vrot.lane.b32.xlu0 %v277, 1
        %v342 = vpop.permute.xlu0 %341
        %343 = vrot.lane.b32.xlu0 %v278, 1
        %v344 = vpop.permute.xlu0 %343
        %vm345 = vcmp.lt.s32.totalorder %v280, 1
        %v346 = vsel %vm345, %v342, %v344
        %v347 = vsel %vm345, %v344, %v342
        %v348 = vsel %vm288, 1, 0
        %v349 = vsel %vm289, 1, 0
        %vm350 = vcmp.eq.s32.totalorder %v348, 1
        %vm351 = vcmp.eq.s32.totalorder %v349, 1
        %v352 = vsel %vm350, %v347, 0.0
        %v353 = vsel %vm351, %v346, 0.0
        %354 = vrot.lane.b32.xlu0 %v277, 127
        %v355 = vpop.permute.xlu0 %354
        %356 = vrot.lane.b32.xlu0 %v278, 127
        %v357 = vpop.permute.xlu0 %356
        %vm358 = vcmp.lt.s32.totalorder %v280, 127
        %v359 = vsel %vm358, %v355, %v357
        %v360 = vsel %vm358, %v357, %v355
        %v361 = vsel %vm290, 1, 0
        %v362 = vsel %vm291, 1, 0
        %vm363 = vcmp.eq.s32.totalorder %v361, 1
        %vm364 = vcmp.eq.s32.totalorder %v362, 1
        %v365 = vsel %vm363, %v359, 0.0
        %v366 = vsel %vm364, %v360, 0.0
        %367 = vrot.lane.b32.xlu0 %v277, 113
        %v368 = vpop.permute.xlu0 %367
        %369 = vrot.lane.b32.xlu0 %v278, 113
        %v370 = vpop.permute.xlu0 %369
        %vm371 = vcmp.lt.s32.totalorder %v280, 113
        %v372 = vsel %vm371, %v368, %v370
        %v373 = vsel %vm371, %v370, %v368
        %v374 = vsel %vm296, 1, 0
        %v375 = vsel %vm297, 1, 0
        %vm376 = vcmp.eq.s32.totalorder %v374, 1
        %vm377 = vcmp.eq.s32.totalorder %v375, 1
        %v378 = vsel %vm376, %v372, 0.0
        %v379 = vsel %vm377, %v373, 0.0
        %380 = vrot.lane.b32.xlu0 %v277, 112
        %v381 = vpop.permute.xlu0 %380
        %382 = vrot.lane.b32.xlu0 %v278, 112
        %v383 = vpop.permute.xlu0 %382
        %vm384 = vcmp.lt.s32.totalorder %v280, 112
        %v385 = vsel %vm384, %v381, %v383
        %v386 = vsel %vm384, %v383, %v381
        %v387 = vsel %vm286, 1, 0
        %v388 = vsel %vm287, 1, 0
        %vm389 = vcmp.eq.s32.totalorder %v387, 1
        %vm390 = vcmp.eq.s32.totalorder %v388, 1
        %v391 = vsel %vm389, %v385, 0.0
        %v392 = vsel %vm390, %v386, 0.0
        %393 = vrot.lane.b32.xlu0 %v277, 111
        %v394 = vpop.permute.xlu0 %393
        %395 = vrot.lane.b32.xlu0 %v278, 111
        %v396 = vpop.permute.xlu0 %395
        %vm397 = vcmp.lt.s32.totalorder %v280, 111
        %v398 = vsel %vm397, %v394, %v396
        %v399 = vsel %vm397, %v396, %v394
        %v400 = vsel %vm298, 1, 0
        %v401 = vsel %vm299, 1, 0
        %vm402 = vcmp.eq.s32.totalorder %v400, 1
        %vm403 = vcmp.eq.s32.totalorder %v401, 1
        %v404 = vsel %vm402, %v398, 0.0
        %v405 = vsel %vm403, %v399, 0.0
        %vm406 = vcmask 588800
        %v408 = vsel %vm406, %v300, 0
        %v411 = vsel %vm406, %v301, 0
        %413 = vmatprep.subr.mxu0 %v314
        %414 = vmatpush1.msra.mxu0 %v313
        %415 = vmatprep.subr.mxu0 %v327
        %416 = vmatpush1.msra.mxu0 %v326
        %417 = vmatprep.subr.mxu0 %v340
        %418 = vmatpush1.msra.mxu0 %v339
        %419 = vmatprep.subr.mxu0 %v353
        %420 = vmatpush1.msra.mxu0 %v352
        %421 = vmatprep.subr.mxu0 %v278
        %422 = vmatpush1.msra.mxu0 %v277
        %423 = vmatprep.subr.mxu0 %v366
        %424 = vmatpush1.msra.mxu0 %v365
        %425 = vmatprep.subr.mxu0 %v379
        %426 = vmatpush1.msra.mxu0 %v378
        %427 = vmatprep.subr.mxu0 %v392
        %428 = vmatpush1.msra.mxu0 %v391
        %429 = vmatprep.subr.mxu0 %v405
        %430 = vmatpush1.msra.mxu0 %v404
        %431 = vmatprep.subr.mxu0 0.0
        %432 = vmatpush1.msra.mxu0 0.0
        %433 = vmatprep.subr.mxu0 0.0
        %434 = vmatpush1.msra.mxu0 0.0
        %435 = vmatprep.subr.mxu0 0.0
        %436 = vmatpush1.msra.mxu0 0.0
        %437 = vmatprep.subr.mxu0 0.0
        %438 = vmatpush1.msra.mxu0 0.0
        %439 = vmatprep.subr.mxu0 0.0
        %440 = vmatpush1.msra.mxu0 0.0
        %441 = vmatprep.subr.mxu0 0.0
        %442 = vmatpush1.msra.mxu0 0.0
        %443 = vmatprep.subr.mxu0 0.0
        %444 = vmatpush1.msra.mxu0 0.0
        %445 = vmatprep.subr.mxu0 0.0
        %446 = vmatpush1.msra.mxu0 0.0
        %447 = vmatprep.subr.mxu0 0.0
        %448 = vmatpush1.msra.mxu0 0.0
        %449 = vmatprep.subr.mxu0 0.0
        %450 = vmatpush1.msra.mxu0 0.0
        %451 = vmatprep.subr.mxu0 0.0
        %452 = vmatpush1.msra.mxu0 0.0
        %453 = vmatprep.subr.mxu0 0.0
        %454 = vmatpush1.msra.mxu0 0.0
        %455 = vmatprep.subr.mxu0 0.0
        %456 = vmatpush1.msra.mxu0 0.0
        %457 = vmatprep.subr.mxu0 0.0
        %458 = vmatpush1.msra.mxu0 0.0
        %459 = vmatprep.subr.mxu0 0.0
        %460 = vmatpush1.msra.mxu0 0.0
        %461 = vmatprep.subr.mxu0 0.0
        %462 = vmatpush1.msra.mxu0 0.0
        %463 = vmatprep.subr.mxu0 0.0
        %464 = vmatpush1.msra.mxu0 0.0
        %465 = vmatprep.subr.mxu0 0.0
        %466 = vmatpush1.msra.mxu0 0.0
        %467 = vmatprep.subr.mxu0 0.0
        %468 = vmatpush1.msra.mxu0 0.0
        %469 = vmatprep.subr.mxu0 0.0
        %470 = vmatpush1.msra.mxu0 0.0
        %471 = vmatprep.subr.mxu0 0.0
        %472 = vmatpush1.msra.mxu0 0.0
        %473 = vmatprep.subr.mxu0 0.0
        %474 = vmatpush1.msra.mxu0 0.0
        %475 = vmatprep.subr.mxu0 0.0
        %476 = vmatpush1.msra.mxu0 0.0
        %477 = vmatprep.mubr.f32.mxu0 0.0
        %478 = vmatmul.mubr.f32.gmra.mrb[0].mxu0 %v408
        %v479 = vpop.f32.mrb[0].mxu0
        %v480 = vadd.f32 0.0, %v479
        %v481 = vpop.f32.mrb[0].mxu0
        %v482 = vadd.f32 0.0, %v481
        %483 = vmatprep.mubr.f32.mxu0 0.0
        %484 = vmatmul.mubr.f32.gmra.mrb[0].mxu0 %v411
        %v485 = vpop.f32.mrb[0].mxu0
        %v486 = vadd.f32 0.0, %v485
        %v487 = vpop.f32.mrb[0].mxu0
        %v488 = vadd.f32 0.0, %v487
        %489 = vdwg.mxu0
        %v490 = vld [vmem:[%s2] sm:$0xff]
        %v491 = vld [vmem:[%s2 + $0x8] sm:$0xff]
        %v492 = vld [vmem:[%s3] sm:$0xff]
        %v493 = vld [vmem:[%s3 + $0x8] sm:$0xff]
        %v494 = vadd.f32 %v480, %v482
        %495 = vadd.xlane.f32.xlu0 %v494
        %v496 = vpop.xlane.xlu0 %495
        %v497 = vadd.f32 %v486, %v488
        %498 = vadd.xlane.f32.xlu0 %v497
        %v499 = vpop.xlane.xlu0 %498
        %v500 = vrcp.pop 256.0
        %v501 = vmul.f32 %v496, %v500
        %v502 = vmul.f32 %v499, %v500
        %v503 = vsub.f32 %v480, %v501
        %v504 = vsub.f32 %v482, %v501
        %v505 = vsub.f32 %v486, %v502
        %v506 = vsub.f32 %v488, %v502
        %v507 = vmul.f32 %v503, %v503
        %v508 = vmul.f32 %v504, %v504
        %v509 = vmul.f32 %v505, %v505
        %v510 = vmul.f32 %v506, %v506
        %v511 = vadd.f32 %v507, %v508
        %512 = vadd.xlane.f32.xlu0 %v511
        %v513 = vpop.xlane.xlu0 %512
        %v514 = vadd.f32 %v509, %v510
        %515 = vadd.xlane.f32.xlu0 %v514
        %v516 = vpop.xlane.xlu0 %515
        %v517 = vmul.f32 %v513, %v500
        %v518 = vmul.f32 %v516, %v500
        %v519 = vadd.f32 %v517, 1e-05
        %v520 = vadd.f32 %v518, 1e-05
        %v521 = vrsqrt.pop %v519
        %v522 = vrsqrt.pop %v520
        %v523 = vmul.f32 %v503, %v521
        %v524 = vmul.f32 %v504, %v521
        %v525 = vmul.f32 %v505, %v522
        %v526 = vmul.f32 %v506, %v522
        %528 = vset.pattern.permute.xlu0 0
        %529 = vperm.xlu0 %528, %v490
        %v530 = vpop.permute.xlu0 %529
        %533 = vset.pattern.permute.xlu0 0
        %534 = vperm.xlu0 %533, %v491
        %v535 = vpop.permute.xlu0 %534
        %v537 = vmul.f32 %v523, %v530
        %v538 = vmul.f32 %v524, %v530
        %v539 = vmul.f32 %v525, %v535
        %v540 = vmul.f32 %v526, %v535
        %542 = vset.pattern.permute.xlu0 0
        %543 = vperm.xlu0 %542, %v492
        %v544 = vpop.permute.xlu0 %543
        %547 = vset.pattern.permute.xlu0 0
        %548 = vperm.xlu0 %547, %v493
        %v549 = vpop.permute.xlu0 %548
        %v551 = vadd.f32 %v537, %v544
        %v552 = vadd.f32 %v538, %v544
        %v553 = vadd.f32 %v539, %v549
        %v554 = vadd.f32 %v540, %v549
        %v555 = vmax.f32 %v551, 0.0
        %v556 = vmax.f32 %v552, 0.0
        %v557 = vld [vmem:[%s4] sm:$0xff]
        %558 = vrot.lane.b32.xlu0 %v555, 17
        %v559 = vpop.permute.xlu0 %558
        %560 = vrot.lane.b32.xlu0 %v556, 17
        %v561 = vpop.permute.xlu0 %560
        %v562 = vsel %vm306, %v559, %v561
        %v563 = vsel %vm306, %v561, %v559
        %v564 = vsel %vm311, %v563, 0.0
        %v565 = vsel %vm312, %v562, 0.0
        %566 = vrot.lane.b32.xlu0 %v555, 16
        %v567 = vpop.permute.xlu0 %566
        %568 = vrot.lane.b32.xlu0 %v556, 16
        %v569 = vpop.permute.xlu0 %568
        %v570 = vsel %vm319, %v567, %v569
        %v571 = vsel %vm319, %v569, %v567
        %v572 = vsel %vm324, %v571, 0.0
        %v573 = vsel %vm325, %v570, 0.0
        %574 = vrot.lane.b32.xlu0 %v555, 15
        %v575 = vpop.permute.xlu0 %574
        %576 = vrot.lane.b32.xlu0 %v556, 15
        %v577 = vpop.permute.xlu0 %576
        %v578 = vsel %vm332, %v575, %v577
        %v579 = vsel %vm332, %v577, %v575
        %v580 = vsel %vm337, %v579, 0.0
        %v581 = vsel %vm338, %v578, 0.0
        %582 = vrot.lane.b32.xlu0 %v555, 1
        %v583 = vpop.permute.xlu0 %582
        %584 = vrot.lane.b32.xlu0 %v556, 1
        %v585 = vpop.permute.xlu0 %584
        %v586 = vsel %vm345, %v583, %v585
        %v587 = vsel %vm345, %v585, %v583
        %v588 = vsel %vm350, %v587, 0.0
        %v589 = vsel %vm351, %v586, 0.0
        %590 = vrot.lane.b32.xlu0 %v555, 127
        %v591 = vpop.permute.xlu0 %590
        %592 = vrot.lane.b32.xlu0 %v556, 127
        %v593 = vpop.permute.xlu0 %592
        %v594 = vsel %vm358, %v591, %v593
        %v595 = vsel %vm358, %v593, %v591
        %v596 = vsel %vm363, %v594, 0.0
        %v597 = vsel %vm364, %v595, 0.0
        %598 = vrot.lane.b32.xlu0 %v555, 113
        %v599 = vpop.permute.xlu0 %598
        %600 = vrot.lane.b32.xlu0 %v556, 113
        %v601 = vpop.permute.xlu0 %600
        %v602 = vsel %vm371, %v599, %v601
        %v603 = vsel %vm371, %v601, %v599
        %v604 = vsel %vm376, %v602, 0.0
        %v605 = vsel %vm377, %v603, 0.0
        %606 = vrot.lane.b32.xlu0 %v555, 112
        %v607 = vpop.permute.xlu0 %606
        %608 = vrot.lane.b32.xlu0 %v556, 112
        %v609 = vpop.permute.xlu0 %608
        %v610 = vsel %vm384, %v607, %v609
        %v611 = vsel %vm384, %v609, %v607
        %v612 = vsel %vm389, %v610, 0.0
        %v613 = vsel %vm390, %v611, 0.0
        %614 = vrot.lane.b32.xlu0 %v555, 111
        %v615 = vpop.permute.xlu0 %614
        %616 = vrot.lane.b32.xlu0 %v556, 111
        %v617 = vpop.permute.xlu0 %616
        %v618 = vsel %vm397, %v615, %v617
        %v619 = vsel %vm397, %v617, %v615
        %v620 = vsel %vm402, %v618, 0.0
        %v621 = vsel %vm403, %v619, 0.0
        %v623 = vsel %vm406, %v557, 0
        %625 = vmatprep.subr.mxu0 %v565
        %626 = vmatpush1.msra.mxu0 %v564
        %627 = vmatprep.subr.mxu0 %v573
        %628 = vmatpush1.msra.mxu0 %v572
        %629 = vmatprep.subr.mxu0 %v581
        %630 = vmatpush1.msra.mxu0 %v580
        %631 = vmatprep.subr.mxu0 %v589
        %632 = vmatpush1.msra.mxu0 %v588
        %633 = vmatprep.subr.mxu0 %v556
        %634 = vmatpush1.msra.mxu0 %v555
        %635 = vmatprep.subr.mxu0 %v597
        %636 = vmatpush1.msra.mxu0 %v596
        %637 = vmatprep.subr.mxu0 %v605
        %638 = vmatpush1.msra.mxu0 %v604
        %639 = vmatprep.subr.mxu0 %v613
        %640 = vmatpush1.msra.mxu0 %v612
        %641 = vmatprep.subr.mxu0 %v621
        %642 = vmatpush1.msra.mxu0 %v620
        %643 = vmatprep.subr.mxu0 0.0
        %644 = vmatpush1.msra.mxu0 0.0
        %645 = vmatprep.subr.mxu0 0.0
        %646 = vmatpush1.msra.mxu0 0.0
        %647 = vmatprep.subr.mxu0 0.0
        %648 = vmatpush1.msra.mxu0 0.0
        %649 = vmatprep.subr.mxu0 0.0
        %650 = vmatpush1.msra.mxu0 0.0
        %651 = vmatprep.subr.mxu0 0.0
        %652 = vmatpush1.msra.mxu0 0.0
        %653 = vmatprep.subr.mxu0 0.0
        %654 = vmatpush1.msra.mxu0 0.0
        %655 = vmatprep.subr.mxu0 0.0
        %656 = vmatpush1.msra.mxu0 0.0
        %657 = vmatprep.subr.mxu0 0.0
        %658 = vmatpush1.msra.mxu0 0.0
        %659 = vmatprep.subr.mxu0 0.0
        %660 = vmatpush1.msra.mxu0 0.0
        %661 = vmatprep.subr.mxu0 0.0
        %662 = vmatpush1.msra.mxu0 0.0
        %663 = vmatprep.subr.mxu0 0.0
        %664 = vmatpush1.msra.mxu0 0.0
        %665 = vmatprep.subr.mxu0 0.0
        %666 = vmatpush1.msra.mxu0 0.0
        %667 = vmatprep.subr.mxu0 0.0
        %668 = vmatpush1.msra.mxu0 0.0
        %669 = vmatprep.subr.mxu0 0.0
        %670 = vmatpush1.msra.mxu0 0.0
        %671 = vmatprep.subr.mxu0 0.0
        %672 = vmatpush1.msra.mxu0 0.0
        %673 = vmatprep.subr.mxu0 0.0
        %674 = vmatpush1.msra.mxu0 0.0
        %675 = vmatprep.subr.mxu0 0.0
        %676 = vmatpush1.msra.mxu0 0.0
        %677 = vmatprep.subr.mxu0 0.0
        %678 = vmatpush1.msra.mxu0 0.0
        %679 = vmatprep.subr.mxu0 0.0
        %680 = vmatpush1.msra.mxu0 0.0
        %681 = vmatprep.subr.mxu0 0.0
        %682 = vmatpush1.msra.mxu0 0.0
        %683 = vmatprep.subr.mxu0 0.0
        %684 = vmatpush1.msra.mxu0 0.0
        %685 = vmatprep.subr.mxu0 0.0
        %686 = vmatpush1.msra.mxu0 0.0
        %687 = vmatprep.subr.mxu0 0.0
        %688 = vmatpush1.msra.mxu0 0.0
        %689 = vmatprep.mubr.f32.mxu0 0.0
        %690 = vmatmul.mubr.f32.gmra.mrb[0].mxu0 %v623
        %v691 = vpop.f32.mrb[0].mxu0
        %v692 = vadd.f32 0.0, %v691
        %v693 = vpop.f32.mrb[0].mxu0
        %v694 = vadd.f32 0.0, %v693
        %695 = vdwg.mxu0
        %v696 = vld [vmem:[%s5] sm:$0xff]
        %v697 = vld [vmem:[%s6] sm:$0xff]
        %v698 = vadd.f32 %v692, %v694
        %699 = vadd.xlane.f32.xlu0 %v698
        %v700 = vpop.xlane.xlu0 %699
        %v701 = vmul.f32 %v700, %v500
        %v702 = vsub.f32 %v692, %v701
        %v703 = vsub.f32 %v694, %v701
        %v704 = vmul.f32 %v702, %v702
        %v705 = vmul.f32 %v703, %v703
        %v706 = vadd.f32 %v704, %v705
        %707 = vadd.xlane.f32.xlu0 %v706
        %v708 = vpop.xlane.xlu0 %707
        %v709 = vmul.f32 %v708, %v500
        %v710 = vadd.f32 %v709, 1e-05
        %v711 = vrsqrt.pop %v710
        %v712 = vmul.f32 %v702, %v711
        %v713 = vmul.f32 %v703, %v711
        %715 = vset.pattern.permute.xlu0 0
        %716 = vperm.xlu0 %715, %v696
        %v717 = vpop.permute.xlu0 %716
        %v719 = vmul.f32 %v712, %v717
        %v720 = vmul.f32 %v713, %v717
        %722 = vset.pattern.permute.xlu0 0
        %723 = vperm.xlu0 %722, %v697
        %v724 = vpop.permute.xlu0 %723
        %v726 = vadd.f32 %v719, %v724
        %v727 = vadd.f32 %v720, %v724
        %v728 = vadd.f32 %v726, %v553
        %v729 = vadd.f32 %v727, %v554
        %v730 = vmax.f32 %v728, 0.0
        %v731 = vmax.f32 %v729, 0.0
        %732 = vst [vmem:[%s271] sm:$0xff] %v730
        %733 = vst [vmem:[%s271 + $0x8] sm:$0xff] %v731
        %s734 = sand.u32 %s181, 1
        %s735 = scalar_lea.sflag [#allocation3], %s734
        %s736 = sand.u32 %s181, 1
        %s737 = smul.addr %s736, 16
        %s738 = scalar_lea.vmem [#allocation2], %s737
        // Predicated region
        $region49: #{tpu_custom_call.1} parent=47 // pred_check
          %p739 = pneg %p191
        $region50: #{tpu_custom_call.1} parent=47 // pred_check_branch
          %741 = sbr.rel (%p739) target = $region52
        $region51: #{tpu_custom_call.1} parent=47 // pred_region
          %s743 = ssub.s32 256, 256
          %744 = vsyncadd %s735, %s743
          %s745 = smul.addr %s21, 2
          %s746 = smul.addr %s745, 128
          %s747 = scalar_lea.hbm %s7, %s746
          %s749 = sshll.u32 %s738, 4
          %s750 = int_to_ptr.vmem [resolvable:$true] %s749
          %752 = dma.vmem_to_hbm [thread:$0]  %s750, 256, %s747, %s735
        $region52: #{tpu_custom_call.1} parent=47 // pred_fallthru
          _
      $region48: #{tpu_custom_call.1} parent=5 // pred_fallthru
        _
      %p753 = scmp.le.s32.totalorder 2, %s16
      // Predicated region
      $region53: #{tpu_custom_call.1} parent=5 // pred_check
        %p754 = pneg %p753
      $region54: #{tpu_custom_call.1} parent=5 // pred_check_branch
        %756 = sbr.rel (%p754) target = $region56
      $region55: #{tpu_custom_call.1} parent=5 // pred_region
        %s757 = ssub.s32 %s16, 2
        // Predicated region
        $region57: #{tpu_custom_call.1} parent=55 // pred_check
          %p758 = pneg %p197
        $region58: #{tpu_custom_call.1} parent=55 // pred_check_branch
          %760 = sbr.rel (%p758) target = $region60
        $region59: #{tpu_custom_call.1} parent=55 // pred_region
          %s761 = sand.u32 %s182, 1
          %s762 = scalar_lea.sflag [#allocation3], %s761
          %s763 = sand.u32 %s182, 1
          %s764 = smul.addr %s763, 16
          %s765 = scalar_lea.vmem [#allocation2], %s764
          %766 = dma.done %s762, 256
        $region60: #{tpu_custom_call.1} parent=55 // pred_fallthru
          _
      $region56: #{tpu_custom_call.1} parent=5 // pred_fallthru
        _
    $region6: #{tpu_custom_call.1} parent=1 // loop_footer
      %s20 = sadd.s32 1, %s16
    $region7: #{tpu_custom_call.1} parent=1 // loop_footer_branch
      %15 = sbr.rel target = $region3
    $region8: #{tpu_custom_call.1} parent=1 // loop_exit
      _
    %767 = vsyncpa [#allocation3], 1
    %s768 = scalar_lea.sflag [#allocation3], 1
    %769 = vsyncpa %s768, 1

</llo_original>
